<compile_context>
chip_gen: v6e
topology: v6e:2x2x1
jax: 0.10.0
libtpu: 0.0.40
codegen_flags: <defaults>
</compile_context>

<pallas_src>
import functools

import jax
import jax.numpy as jnp
from jax.experimental import pallas as pl
from jax.experimental.pallas import tpu as pltpu

_LANE = 128  # lane width: feature / class dims padded to multiples of this


def _round_up(x, m):
    return ((x + m - 1) // m) * m


def _pad2d(a, rows, cols, dtype=None):
    r, c = a.shape
    out = jnp.pad(a, ((0, rows - r), (0, cols - c)))
    return out.astype(dtype) if dtype is not None else out


def _largest_divisor(n, candidates):
    for c in candidates:
        if c <= n and n % c == 0:
            return c
    return n


def _pow2_divisor(x):
    return x & (-x)


def _node_tiles(n):
    """(n_pad, tm, tk): row tile tm, A-column (reduction) tile tk; tk % tm == 0."""
    if n >= 2048:
        tm = 512
        n_pad = _round_up(n, tm)
        tk = 1024 if n_pad % 1024 == 0 else 512
    elif n >= 512:
        tm = 256
        n_pad = _round_up(n, tm)
        tk = 512 if n_pad % 512 == 0 else 256
    else:
        # Tiny graphs: keep >= 2 row tiles (both v7x TensorCores busy); tm stays
        # a multiple of 32 so int8 A tiles are layout-legal.
        n_pad = _round_up(max(n, 64), 64)
        tm = n_pad // 2
        tk = n_pad
    return n_pad, tm, tk


# ----------------------------------------------------------------------------
# Kernel 1: dinv = (rowsum(A) + 1)^-1/2   (the +1 is the self loop of A + I)
# ----------------------------------------------------------------------------
def _deg_inv_sqrt_kernel(a_ref, o_ref):
    k = pl.program_id(1)

    @pl.when(k == 0)
    def _():
        o_ref[...] = jnp.zeros_like(o_ref)

    o_ref[...] += jnp.sum(a_ref[...].astype(jnp.float32), axis=-1, keepdims=True)

    @pl.when(k == pl.num_programs(1) - 1)
    def _():
        o_ref[...] = jax.lax.rsqrt(o_ref[...] + 1.0)


def deg_inv_sqrt(a, tm):
    n = a.shape[0]
    tk = _largest_divisor(n, (2048, 1024, 512, 256, 128))  # wide memory-bound rowsum
    return pl.pallas_call(
        _deg_inv_sqrt_kernel,
        out_shape=jax.ShapeDtypeStruct((n, 1), jnp.float32),
        grid_spec=pltpu.PrefetchScalarGridSpec(
            num_scalar_prefetch=0,
            grid=(n // tm, n // tk),
            in_specs=[pl.BlockSpec((tm, tk), lambda i, k: (i, k))],
            out_specs=pl.BlockSpec((tm, 1), lambda i, k: (i, 0)),
        ),
        compiler_params=pltpu.CompilerParams(
            dimension_semantics=("parallel", "arbitrary")),
    )(a)


# ----------------------------------------------------------------------------
# Kernel 2: layer 0, out = relu(x @ W + b)
# Grid: (row tiles "parallel", feature-K tiles "arbitrary") with f32 accumulator
# so large nfeat never exceeds the scoped-VMEM limit (v7x: 64 MiB physical).
# ----------------------------------------------------------------------------
def _linear_relu_kernel(x_ref, w_ref, b_ref, o_ref, acc_ref):
    k = pl.program_id(1)

    @pl.when(k == 0)
    def _():
        acc_ref[...] = jnp.zeros_like(acc_ref)

    acc_ref[...] += jnp.dot(x_ref[...], w_ref[...],
                            preferred_element_type=jnp.float32)

    @pl.when(k == pl.num_programs(1) - 1)
    def _():
        o_ref[...] = jnp.maximum(acc_ref[...] + b_ref[...], 0.0).astype(o_ref.dtype)


def linear_relu(x, w, b, tm):
    n, f = x.shape
    hout = w.shape[1]
    fk = _largest_divisor(f, (512, 256, 128))
    return pl.pallas_call(
        _linear_relu_kernel,
        out_shape=jax.ShapeDtypeStruct((n, hout), jnp.bfloat16),
        grid_spec=pltpu.PrefetchScalarGridSpec(
            num_scalar_prefetch=0,
            grid=(n // tm, f // fk),
            in_specs=[pl.BlockSpec((tm, fk), lambda i, k: (i, k)),
                      pl.BlockSpec((fk, hout), lambda i, k: (k, 0)),
                      pl.BlockSpec((1, hout), lambda i, k: (0, 0))],
            out_specs=pl.BlockSpec((tm, hout), lambda i, k: (i, 0)),
            scratch_shapes=[pltpu.VMEM((tm, hout), jnp.float32)],
        ),
        compiler_params=pltpu.CompilerParams(
            dimension_semantics=("parallel", "arbitrary")),
    )(x, w, b)


# ----------------------------------------------------------------------------
# Kernel 3: GCN feature transform, g = dinv * (h @ W)
# Same (row, feature-K) grid structure as linear_relu.
# ----------------------------------------------------------------------------
def _xw_scale_kernel(h_ref, w_ref, d_ref, o_ref, acc_ref):
    k = pl.program_id(1)

    @pl.when(k == 0)
    def _():
        acc_ref[...] = jnp.zeros_like(acc_ref)

    acc_ref[...] += jnp.dot(h_ref[...], w_ref[...],
                            preferred_element_type=jnp.float32)

    @pl.when(k == pl.num_programs(1) - 1)
    def _():
        o_ref[...] = (d_ref[...] * acc_ref[...]).astype(o_ref.dtype)


def xw_scale(h, w, dinv, tm):
    n, hin = h.shape
    hout = w.shape[1]
    fk = _largest_divisor(hin, (512, 256, 128))
    return pl.pallas_call(
        _xw_scale_kernel,
        out_shape=jax.ShapeDtypeStruct((n, hout), jnp.bfloat16),
        grid_spec=pltpu.PrefetchScalarGridSpec(
            num_scalar_prefetch=0,
            grid=(n // tm, hin // fk),
            in_specs=[pl.BlockSpec((tm, fk), lambda i, k: (i, k)),
                      pl.BlockSpec((fk, hout), lambda i, k: (k, 0)),
                      pl.BlockSpec((tm, 1), lambda i, k: (i, 0))],
            out_specs=pl.BlockSpec((tm, hout), lambda i, k: (i, 0)),
            scratch_shapes=[pltpu.VMEM((tm, hout), jnp.float32)],
        ),
        compiler_params=pltpu.CompilerParams(
            dimension_semantics=("parallel", "arbitrary")),
    )(h, w, dinv)


# ----------------------------------------------------------------------------
# Kernel 4: GCN aggregation with fused normalization + bias + relu/log_softmax
#   out = dinv * (A @ g + g) + b          (== A_hat @ (h @ W) + b)
# Grid: (row tiles "parallel", A-column tiles "arbitrary"), f32 accumulator.
# A is int8 (binary graphs) upcast to bf16 in-kernel; the self-loop term g_i is
# sliced out of the g_k block that contains row band i (tk % tm == 0).
# ----------------------------------------------------------------------------
def _aggregate_kernel(a_ref, g_ref, d_ref, b_ref, o_ref, acc_ref, *,
                      tm, tk, epilogue, nclass):
    i = pl.program_id(0)
    k = pl.program_id(1)

    @pl.when(k == 0)
    def _():
        acc_ref[...] = jnp.zeros_like(acc_ref)

    acc_ref[...] += jnp.dot(a_ref[...].astype(jnp.bfloat16), g_ref[...],
                            preferred_element_type=jnp.float32)

    # Self-loop term of (A + I): row block i is fully contained in exactly one
    # column tile because tk % tm == 0; add that slice of g exactly once.
    @pl.when(k == (i * tm) // tk)
    def _():
        off = pl.multiple_of((i * tm) % tk, _pow2_divisor(tm))
        acc_ref[...] += g_ref[pl.ds(off, tm), :].astype(jnp.float32)

    @pl.when(k == pl.num_programs(1) - 1)
    def _():
        h = d_ref[...] * acc_ref[...] + b_ref[...]
        if epilogue == "relu":
            o_ref[...] = jnp.maximum(h, 0.0).astype(o_ref.dtype)
        else:  # masked log_softmax over the first `nclass` (real) lanes
            lane = jax.lax.broadcasted_iota(jnp.int32, h.shape, dimension=1)
            valid = lane < nclass
            hm = jnp.where(valid, h, jnp.float32(-1e30))
            m = jnp.max(hm, axis=-1, keepdims=True)
            z = hm - m
            lse = jnp.log(jnp.sum(jnp.exp(z), axis=-1, keepdims=True))
            o_ref[...] = jnp.where(valid, z - lse, 0.0).astype(o_ref.dtype)


def aggregate(a, g, dinv, b, tm, tk, *, epilogue, nclass, out_dtype):
    n = a.shape[0]
    hout = g.shape[1]
    kernel = functools.partial(_aggregate_kernel, tm=tm, tk=tk,
                               epilogue=epilogue, nclass=nclass)
    # TODO(synk): on v7x, sweep pipeline_mode=pl.Buffered(3) on the A BlockSpec.
    return pl.pallas_call(
        kernel,
        out_shape=jax.ShapeDtypeStruct((n, hout), out_dtype),
        grid_spec=pltpu.PrefetchScalarGridSpec(
            num_scalar_prefetch=0,
            grid=(n // tm, n // tk),
            in_specs=[pl.BlockSpec((tm, tk), lambda i, k: (i, k)),     # A_ik (int8/bf16)
                      pl.BlockSpec((tk, hout), lambda i, k: (k, 0)),   # g_k  (matmul RHS)
                      pl.BlockSpec((tm, 1), lambda i, k: (i, 0)),      # dinv_i
                      pl.BlockSpec((1, hout), lambda i, k: (0, 0))],   # bias
            out_specs=pl.BlockSpec((tm, hout), lambda i, k: (i, 0)),
            scratch_shapes=[pltpu.VMEM((tm, hout), jnp.float32)],
        ),
        compiler_params=pltpu.CompilerParams(
            dimension_semantics=("parallel", "arbitrary")),
    )(a, g, dinv, b)


# ----------------------------------------------------------------------------
# Model: parameter init + forward
# ----------------------------------------------------------------------------
def init_aggre_gcn_params(key, nfeat, nhid, nclass, num_layers):
    """Deterministic params. Stored as (W (in,out), bias (1,out)) in f32."""
    dims = [(nfeat, nhid)]
    for _ in range(num_layers - 2):
        dims.append((nhid, nhid))
    dims.append((nhid, nclass))
    params = []
    for d_in, d_out in dims:
        key, kw = jax.random.split(key)
        scale = jnp.sqrt(6.0 / (d_in + d_out)).astype(jnp.float32)  # glorot-ish
        w = jax.random.uniform(kw, (d_in, d_out), jnp.float32, -scale, scale)
        b = jnp.zeros((1, d_out), jnp.float32)
        params.append((w, b))
    return params


def aggre_gcn_forward(params, x, adj, dropout_p=0.5, training=False,
                      binary_adj=True):
    # TODO(synk): dropout is the identity in eval mode; training-mode dropout not implemented.
    del dropout_p, training
    n, nfeat = x.shape
    nclass = params[-1][0].shape[1]

    n_pad, tm, tk = _node_tiles(n)
    f_pad = _round_up(nfeat, _LANE)

    # bf16 MXU operands with f32 accumulation.  A stored int8 for binary 0/1
    # adjacencies (halves the dominant HBM stream, upcast in-kernel); use
    # binary_adj=False for edge-weighted adjacencies (bf16 storage).
    x_p = _pad2d(x, n_pad, f_pad, jnp.bfloat16)
    a_dtype = jnp.int8 if binary_adj else jnp.bfloat16
    a_p = _pad2d(adj, n_pad, n_pad).astype(a_dtype)

    padded_params = []
    for w, b in params:
        d_in, d_out = w.shape
        padded_params.append(
            (_pad2d(w, _round_up(d_in, _LANE), _round_up(d_out, _LANE),
                    jnp.bfloat16),                      # W pre-cast to bf16 once
             _pad2d(b, 1, _round_up(d_out, _LANE))))    # bias stays f32 (tiny)

    # D^-1/2 of (A + I): the normalized adjacency is never materialized.
    dinv = deg_inv_sqrt(a_p, tm)

    # layer 0: Linear + ReLU (+ dropout)
    w0, b0 = padded_params[0]
    h = linear_relu(x_p, w0, b0, tm)

    # hidden GCNConv layers + ReLU (+ dropout)
    for w, b in padded_params[1:-1]:
        g = xw_scale(h, w, dinv, tm)
        h = aggregate(a_p, g, dinv, b, tm, tk, epilogue="relu",
                      out_dtype=jnp.bfloat16, nclass=0)

    # last GCNConv with log_softmax fused into the epilogue
    w, b = padded_params[-1]
    g = xw_scale(h, w, dinv, tm)
    out = aggregate(a_p, g, dinv, b, tm, tk, epilogue="log_softmax",
                    out_dtype=jnp.float32, nclass=nclass)
    return out[:n, :nclass]


# ----------------------------------------------------------------------------
# Pure-JAX f32 reference (original A_hat formulation) for validation
# ----------------------------------------------------------------------------
def _reference_forward(params, x, adj):
    n = x.shape[0]
    a = adj + jnp.eye(n, dtype=adj.dtype)
    dinv = 1.0 / jnp.sqrt(jnp.sum(a, axis=-1, keepdims=True))
    a_hat = dinv * a * dinv.reshape(1, n)
    w0, b0 = params[0]
    h = jax.nn.relu(x @ w0 + b0)
    for w, b in params[1:-1]:
        h = jax.nn.relu(a_hat @ (h @ w) + b)
    w, b = params[-1]
    return jax.nn.log_softmax(a_hat @ (h @ w) + b, axis=-1)


# ----------------------------------------------------------------------------
if __name__ == "__main__":
    N, NFEAT, NHID, NCLASS, NUM_LAYERS = 64, 32, 32, 8, 3

    key = jax.random.PRNGKey(0)
    k_x, k_adj, k_par = jax.random.split(key, 3)

    x = jax.random.normal(k_x, (N, NFEAT), jnp.float32)

    # random symmetric 0/1 adjacency (no self loops; the +1 in deg handles A + I)
    a = (jax.random.uniform(k_adj, (N, N)) < 0.1).astype(jnp.float32)
    adj = jnp.maximum(a, a.T) * (1.0 - jnp.eye(N, dtype=jnp.float32))

    params = init_aggre_gcn_params(k_par, NFEAT, NHID, NCLASS, NUM_LAYERS)

    out = aggre_gcn_forward(params, x, adj)
    jax.block_until_ready(out)

    assert out.shape == (N, NCLASS)
    # rows of log_softmax must exp-sum to 1
    assert bool(jnp.allclose(jnp.sum(jnp.exp(out), axis=-1), 1.0, atol=1e-3))
    # bf16 MXU operands with f32 accumulation: compare against f32 reference
    ref = _reference_forward(params, x, adj)
    max_err = float(jnp.max(jnp.abs(out - ref)))
    assert max_err < 0.1, f"max |out - ref| = {max_err}"
    print("KERNEL_OK")
</pallas_src>

<mosaic_0001>
module attributes {stable_mosaic.version = 11 : i64} {
  func.func @_deg_inv_sqrt_kernel(%arg0: i32, %arg1: i32, %arg2: memref<32x64xi8, #tpu.memory_space<vmem>>, %arg3: memref<32x1xf32, #tpu.memory_space<vmem>>) attributes {dimension_semantics = [#tpu.dimension_semantics<parallel>, #tpu.dimension_semantics<arbitrary>], iteration_bounds = array<i64: 2, 1>, scalar_prefetch = 0 : i64, scratch_operands = 0 : i64, tpu.core_type = #tpu.core_type<tc>, window_params = [{transform_indices = @transform_0, window_bounds = array<i64: 32, 64>}, {transform_indices = @transform_1, window_bounds = array<i64: 32, 1>}]} {
    %c0_i32 = arith.constant 0 : i32
    %0 = arith.cmpi eq, %arg1, %c0_i32 : i32
    %1 = arith.extui %0 : i1 to i32
    %c0_i32_0 = arith.constant 0 : i32
    %2 = arith.cmpi ne, %1, %c0_i32_0 : i32
    scf.if %2 {
      %cst_8 = arith.constant 0.000000e+00 : f32
      %13 = vector.broadcast %cst_8 : f32 to vector<32x1xf32>
      %c0_9 = arith.constant 0 : index
      %c0_10 = arith.constant 0 : index
      %14 = vector.load %arg3[%c0_9, %c0_10] : memref<32x1xf32, #tpu.memory_space<vmem>>, vector<32x1xf32>
      tpu.vector_store %arg3[%c0_9, %c0_10], %13 {strides = array<i32>} : memref<32x1xf32, #tpu.memory_space<vmem>>, vector<32x1xf32>,
    } else {
    }
    %c0 = arith.constant 0 : index
    %c0_1 = arith.constant 0 : index
    %3 = vector.load %arg3[%c0, %c0_1] : memref<32x1xf32, #tpu.memory_space<vmem>>, vector<32x1xf32>
    %c0_2 = arith.constant 0 : index
    %c0_3 = arith.constant 0 : index
    %4 = vector.load %arg2[%c0_2, %c0_3] : memref<32x64xi8, #tpu.memory_space<vmem>>, vector<32x64xi8>
    %5 = arith.sitofp %4 : vector<32x64xi8> to vector<32x64xf32>
    %cst = arith.constant dense<0.000000e+00> : vector<32xf32>
    %6 = vector.multi_reduction <add>, %5, %cst [1] : vector<32x64xf32> to vector<32xf32>
    %7 = vector.shape_cast %6 : vector<32xf32> to vector<32x1xf32>
    %8 = arith.addf %3, %7 : vector<32x1xf32>
    %c0_4 = arith.constant 0 : index
    %c0_5 = arith.constant 0 : index
    %9 = vector.load %arg3[%c0_4, %c0_5] : memref<32x1xf32, #tpu.memory_space<vmem>>, vector<32x1xf32>
    tpu.vector_store %arg3[%c0_4, %c0_5], %8 {strides = array<i32>} : memref<32x1xf32, #tpu.memory_space<vmem>>, vector<32x1xf32>,
    %c0_i32_6 = arith.constant 0 : i32
    %10 = arith.cmpi eq, %arg1, %c0_i32_6 : i32
    %11 = arith.extui %10 : i1 to i32
    %c0_i32_7 = arith.constant 0 : i32
    %12 = arith.cmpi ne, %11, %c0_i32_7 : i32
    scf.if %12 {
      %c0_8 = arith.constant 0 : index
      %c0_9 = arith.constant 0 : index
      %13 = vector.load %arg3[%c0_8, %c0_9] : memref<32x1xf32, #tpu.memory_space<vmem>>, vector<32x1xf32>
      %cst_10 = arith.constant 1.000000e+00 : f32
      %14 = vector.broadcast %cst_10 : f32 to vector<32x1xf32>
      %15 = arith.addf %13, %14 : vector<32x1xf32>
      %16 = math.rsqrt %15 : vector<32x1xf32>
      %c0_11 = arith.constant 0 : index
      %c0_12 = arith.constant 0 : index
      %17 = vector.load %arg3[%c0_11, %c0_12] : memref<32x1xf32, #tpu.memory_space<vmem>>, vector<32x1xf32>
      tpu.vector_store %arg3[%c0_11, %c0_12], %16 {strides = array<i32>} : memref<32x1xf32, #tpu.memory_space<vmem>>, vector<32x1xf32>,
    } else {
    }
    return
  }
  func.func @transform_0(%arg0: i32, %arg1: i32) -> (i32, i32) {
    %c0_i32 = arith.constant 0 : i32
    return %arg0, %arg1 : i32, i32
  }
  func.func @transform_1(%arg0: i32, %arg1: i32) -> (i32, i32) {
    %c0_i32 = arith.constant 0 : i32
    %c0_i32_0 = arith.constant 0 : i32
    return %arg0, %c0_i32 : i32, i32
  }
}

</mosaic_0001>

<llo_original>
// kernel: tpu_custom_call.1
$region0: #{tpu_custom_call.1}
  #allocation0 [shape = 'u32[]', space=smem, size = 0x4, offset = 0x4, fixed_abs, tag = 'smem constant byte address 0x4 - core index']
  #allocation1 [shape = 'u32[144,128]{1,0:T(1,128)}', space=vmem, size = 0x12000, scoped, tag = 'internal scratch']
  %s0 = inlined_call_operand.hbm [shape: s8[64,64], index: 0, kind: input, shape index: {}]
  %s1 = inlined_call_operand.vmem [shape: f32[64,1], index: 1, kind: output, shape index: {}]
  %s2 = sld [smem:[#allocation0]]
  $region49: #{tpu_custom_call.1} parent=0
    _
  %s4 = ssub.s32 1, %s2
  %s5 = scalar_select 0, %s4, %s2
  $region1: #{tpu_custom_call.1} parent=0
    #allocation2 [shape = 'u8[8192]{0}', space=vmem, size = 0x2000, scoped, tag = 'input window, operand 0']
    #allocation3 [shape = 's32[2]{0}', space=sflag, size = 0x8, scoped, tag = 'scoped memory for tpu_custom_call.1']
    %6 = vsyncpa [#allocation3], 0
    %s7 = scalar_lea.sflag [#allocation3], 1
    %8 = vsyncpa %s7, 0
    loop: start=0, step=1, limit=4
    $region2: #{tpu_custom_call.1} parent=1 // loop_pre_header
      _
    $region3: #{tpu_custom_call.1} parent=1 // loop_header
      %s10 = sphi 0, %s14
      %p11 = scmp.ge.s32.totalorder %s10, 4
      %s17 = sphi 0, %s29
      %s18 = sphi 0, %s25
      %s19 = sphi 0, %s17
      %s20 = sphi 0, %s18
      %s21 = sphi 0, %s19
      %s22 = sphi 0, %s20
      %s34 = sphi 0, %s36
      %s37 = sphi 0, %s34
      %s38 = sphi 0, %s37
      %s54 = sphi 0, %s38
      %s60 = sphi 0, %s62
      %s63 = sphi 0, %s60
      %s64 = sphi 0, %s63
      %s80 = sphi 0, %s64
    $region4: #{tpu_custom_call.1} parent=1 // loop_header_branch
      %13 = sbr.rel (%p11) target = $region8
    $region5: #{tpu_custom_call.1} parent=1 // loop_body
      %s15 = ssub.s32 %s10, 1
      %s16 = ssub.s32 %s10, 2
      %s23 = sadd.s32 1, %s18
      %p24 = scmp.ge.s32.totalorder %s23, 1
      %s25 = scalar_select %p24, 0, %s23
      %s26 = sadd.s32 1, %s17
      %s27 = scalar_select %p24, %s26, %s17
      %p28 = scmp.ge.s32.totalorder %s27, 2
      %s29 = scalar_select %p28, 0, %s27
      %s30 = ssub.s32 %s17, %s29
      %s31 = ssub.s32 %s18, %s25
      %s32 = sor.u32 %s30, %s31
      %p33 = scmp.eq.s32.totalorder %s32, 0
      %s35 = sadd.s32 %s34, 1
      %s36 = scalar_select %p33, %s34, %s35
      %p39 = pneg %p33
      %p40 = scmp.eq.s32.totalorder %s10, 1
      %p41 = por %p39, %p40
      %p42 = scmp.ne.s32.totalorder %s34, %s37
      %p43 = scmp.eq.s32.totalorder %s10, 0
      %p44 = por %p42, %p43
      %p45 = scmp.ne.s32.totalorder %s34, %s37
      %p46 = scmp.eq.s32.totalorder %s15, 1
      %p47 = por %p45, %p46
      %p48 = scmp.ne.s32.totalorder %s37, %s38
      %p49 = scmp.eq.s32.totalorder %s15, 0
      %p50 = por %p48, %p49
      %p51 = scmp.ne.s32.totalorder %s37, %s38
      %p52 = scmp.eq.s32.totalorder %s16, 1
      %p53 = por %p51, %p52
      %p55 = scmp.ne.s32.totalorder %s38, %s54
      %p56 = scmp.eq.s32.totalorder %s16, 0
      %p57 = por %p55, %p56
      %s58 = ssub.s32 %s17, %s29
      %p59 = scmp.eq.s32.totalorder %s58, 0
      %s61 = sadd.s32 %s60, 1
      %s62 = scalar_select %p59, %s60, %s61
      %p65 = pneg %p59
      %p66 = scmp.eq.s32.totalorder %s10, 1
      %p67 = por %p65, %p66
      %p68 = scmp.ne.s32.totalorder %s60, %s63
      %p69 = scmp.eq.s32.totalorder %s10, 0
      %p70 = por %p68, %p69
      %p71 = scmp.ne.s32.totalorder %s60, %s63
      %p72 = scmp.eq.s32.totalorder %s15, 1
      %p73 = por %p71, %p72
      %p74 = scmp.ne.s32.totalorder %s63, %s64
      %p75 = scmp.eq.s32.totalorder %s15, 0
      %p76 = por %p74, %p75
      %p77 = scmp.ne.s32.totalorder %s63, %s64
      %p78 = scmp.eq.s32.totalorder %s16, 1
      %p79 = por %p77, %p78
      %p81 = scmp.ne.s32.totalorder %s64, %s80
      %p82 = scmp.eq.s32.totalorder %s16, 0
      %p83 = por %p81, %p82
      %p84 = scmp.le.s32.totalorder 1, %s10
      %p85 = scmp.lt.s32.totalorder %s10, 3
      %p86 = pnand %p84, %p85
      %p87 = pneg %p86
      // Predicated region
      $region9: #{tpu_custom_call.1} parent=5 // pred_check
        _
      $region10: #{tpu_custom_call.1} parent=5 // pred_check_branch
        %89 = sbr.rel (%p86) target = $region12
      $region11: #{tpu_custom_call.1} parent=5 // pred_region
        %s90 = ssub.s32 %s10, 1
      $region12: #{tpu_custom_call.1} parent=5 // pred_fallthru
        _
      %p91 = scmp.lt.s32.totalorder %s10, 2
      // Predicated region
      $region13: #{tpu_custom_call.1} parent=5 // pred_check
        %p92 = pneg %p91
      $region14: #{tpu_custom_call.1} parent=5 // pred_check_branch
        %94 = sbr.rel (%p92) target = $region16
      $region15: #{tpu_custom_call.1} parent=5 // pred_region
        // Predicated region
        $region17: #{tpu_custom_call.1} parent=15 // pred_check
          %p95 = pneg %p44
        $region18: #{tpu_custom_call.1} parent=15 // pred_check_branch
          %97 = sbr.rel (%p95) target = $region20
        $region19: #{tpu_custom_call.1} parent=15 // pred_region
          %s98 = sand.u32 %s34, 1
          %s99 = scalar_lea.sflag [#allocation3], %s98
          %s100 = sand.u32 %s34, 1
          %s101 = smul.addr %s100, 8
          %s102 = scalar_lea.vmem [#allocation2], %s101
          %s104 = ssub.s32 128, 128
          %105 = vsyncadd %s99, %s104
          %s106 = sadd.s32 %s18, %s17
          %s107 = smul.addr %s106, 128
          %s108 = scalar_lea.hbm %s0, %s107
          %s110 = sshll.u32 %s102, 4
          %s111 = int_to_ptr.vmem [resolvable:$true] %s110
          %113 = dma.hbm_to_vmem [thread:$0]  %s108, 128, %s111, %s99
        $region20: #{tpu_custom_call.1} parent=15 // pred_fallthru
          _
      $region16: #{tpu_custom_call.1} parent=5 // pred_fallthru
        _
      %p114 = scmp.le.s32.totalorder 1, %s10
      %p115 = scmp.lt.s32.totalorder %s10, 3
      %p116 = pnand %p114, %p115
      %p117 = pneg %p116
      // Predicated region
      $region21: #{tpu_custom_call.1} parent=5 // pred_check
        _
      $region22: #{tpu_custom_call.1} parent=5 // pred_check_branch
        %119 = sbr.rel (%p116) target = $region24
      $region23: #{tpu_custom_call.1} parent=5 // pred_region
        %s120 = ssub.s32 %s10, 1
        %s121 = sand.u32 %s37, 1
        %s122 = scalar_lea.sflag [#allocation3], %s121
        %s123 = sand.u32 %s37, 1
        %s124 = smul.addr %s123, 8
        %s125 = scalar_lea.vmem [#allocation2], %s124
        // Predicated region
        $region25: #{tpu_custom_call.1} parent=23 // pred_check
          %p126 = pneg %p50
        $region26: #{tpu_custom_call.1} parent=23 // pred_check_branch
          %128 = sbr.rel (%p126) target = $region28
        $region27: #{tpu_custom_call.1} parent=23 // pred_region
          %129 = dma.done %s122, 128
        $region28: #{tpu_custom_call.1} parent=23 // pred_fallthru
          _
        %s130 = sand.u32 %s37, 1
        %s131 = scalar_lea.sflag [#allocation3], %s130
        %s132 = sand.u32 %s37, 1
        %s133 = smul.addr %s132, 8
        %s134 = scalar_lea.vmem [#allocation2], %s133
        %p135 = pneg %p50
        %p136 = pneg %p47
        %p137 = pneg %p76
        %p138 = pneg %p73
        %s139 = smul.u32 4, %s19
        %p140 = scmp.lt.s32.totalorder %s139, 7
        %s141 = scalar_select %p140, %s139, 7
        %s142 = smul.addr %s141, 8
        %s143 = scalar_lea.vmem %s1, %s142
        %s144 = smul.u32 4, %s19
        %p145 = scmp.lt.s32.totalorder %s144, 7
        %s146 = scalar_select %p145, %s144, 7
        %s147 = smul.addr %s146, 8
        %s148 = scalar_lea.vmem %s1, %s147
        %s149 = smul.u32 4, %s19
        %p150 = scmp.eq.s32.totalorder %s20, 0
        // Predicated region
        $region29: #{tpu_custom_call.1} parent=23 // pred_check
          %p151 = pneg %p150
        $region30: #{tpu_custom_call.1} parent=23 // pred_check_branch
          %153 = sbr.rel (%p151) target = $region32
        $region31: #{tpu_custom_call.1} parent=23 // pred_region
          %vm154 = vcmask 7168
          %155 = vst.msk [vmem:[%s148] sm:$0xff] %vm154, 0.0
          %156 = vst.msk [vmem:[%s148 + $0x8] sm:$0xff] %vm154, 0.0
          %157 = vst.msk [vmem:[%s148 + $0x10] sm:$0xff] %vm154, 0.0
          %158 = vst.msk [vmem:[%s148 + $0x18] sm:$0xff] %vm154, 0.0
        $region32: #{tpu_custom_call.1} parent=23 // pred_fallthru
          _
        %v159 = vld [vmem:[%s148] sm:$0xff]
        %v160 = vld [vmem:[%s148 + $0x8] sm:$0xff]
        %v161 = vld [vmem:[%s148 + $0x10] sm:$0xff]
        %v162 = vld [vmem:[%s148 + $0x18] sm:$0xff]
        %v163 = vld [vmem:[%s125] sm:$0xff]
        %v164 = vunpack.c.0.s8 %v163
        %v165 = vunpack.c.1.s8 %v163
        %v166 = vunpack.c.2.s8 %v163
        %v167 = vunpack.c.3.s8 %v163
        %v168 = vcvt.s32.f32 %v164
        %v169 = vcvt.s32.f32 %v165
        %v170 = vcvt.s32.f32 %v166
        %v171 = vcvt.s32.f32 %v167
        %vm172 = vcmask 523264
        %v173 = vsel %vm172, %v168, 0.0
        %174 = vadd.xlane.f32.xlu0 %v173
        %v175 = vpop.xlane.xlu0 %174
        %v176 = vsel %vm172, %v169, 0.0
        %177 = vadd.xlane.f32.xlu0 %v176
        %v178 = vpop.xlane.xlu0 %177
        %v179 = vsel %vm172, %v170, 0.0
        %180 = vadd.xlane.f32.xlu0 %v179
        %v181 = vpop.xlane.xlu0 %180
        %v182 = vsel %vm172, %v171, 0.0
        %183 = vadd.xlane.f32.xlu0 %v182
        %v184 = vpop.xlane.xlu0 %183
        %v185 = vadd.f32 %v159, %v175
        %v186 = vadd.f32 %v160, %v178
        %v187 = vadd.f32 %v161, %v181
        %v188 = vadd.f32 %v162, %v184
        %vm189 = vcmask 7168
        %190 = vst.msk [vmem:[%s148] sm:$0xff] %vm189, %v185
        %191 = vst.msk [vmem:[%s148 + $0x8] sm:$0xff] %vm189, %v186
        %192 = vst.msk [vmem:[%s148 + $0x10] sm:$0xff] %vm189, %v187
        %193 = vst.msk [vmem:[%s148 + $0x18] sm:$0xff] %vm189, %v188
        // Predicated region
        $region33: #{tpu_custom_call.1} parent=23 // pred_check
          %p194 = pneg %p150
        $region34: #{tpu_custom_call.1} parent=23 // pred_check_branch
          %196 = sbr.rel (%p194) target = $region36
        $region35: #{tpu_custom_call.1} parent=23 // pred_region
          %v197 = vld [vmem:[%s148] sm:$0xff]
          %v198 = vld [vmem:[%s148 + $0x8] sm:$0xff]
          %v199 = vld [vmem:[%s148 + $0x10] sm:$0xff]
          %v200 = vld [vmem:[%s148 + $0x18] sm:$0xff]
          %v201 = vadd.f32 %v197, 1.0
          %v202 = vadd.f32 %v198, 1.0
          %v203 = vadd.f32 %v199, 1.0
          %v204 = vadd.f32 %v200, 1.0
          %v205 = vrsqrt.pop %v201
          %v206 = vrsqrt.pop %v202
          %v207 = vrsqrt.pop %v203
          %v208 = vrsqrt.pop %v204
          %209 = vst.msk [vmem:[%s148] sm:$0xff] %vm189, %v205
          %210 = vst.msk [vmem:[%s148 + $0x8] sm:$0xff] %vm189, %v206
          %211 = vst.msk [vmem:[%s148 + $0x10] sm:$0xff] %vm189, %v207
          %212 = vst.msk [vmem:[%s148 + $0x18] sm:$0xff] %vm189, %v208
        $region36: #{tpu_custom_call.1} parent=23 // pred_fallthru
          _
        %s213 = smul.u32 4, %s19
        %p214 = scmp.lt.s32.totalorder %s213, 7
        %s215 = scalar_select %p214, %s213, 7
        %s216 = smul.addr %s215, 8
        %s217 = scalar_lea.vmem %s1, %s216
        // Predicated region
        $region37: #{tpu_custom_call.1} parent=23 // pred_check
          %p218 = pneg %p73
        $region38: #{tpu_custom_call.1} parent=23 // pred_check_branch
          %220 = sbr.rel (%p218) target = $region40
        $region39: #{tpu_custom_call.1} parent=23 // pred_region
          %s221 = smul.u32 4, %s19
        $region40: #{tpu_custom_call.1} parent=23 // pred_fallthru
          _
      $region24: #{tpu_custom_call.1} parent=5 // pred_fallthru
        _
      %p222 = scmp.le.s32.totalorder 2, %s10
      // Predicated region
      $region41: #{tpu_custom_call.1} parent=5 // pred_check
        %p223 = pneg %p222
      $region42: #{tpu_custom_call.1} parent=5 // pred_check_branch
        %225 = sbr.rel (%p223) target = $region44
      $region43: #{tpu_custom_call.1} parent=5 // pred_region
        %s226 = ssub.s32 %s10, 2
        // Predicated region
        $region45: #{tpu_custom_call.1} parent=43 // pred_check
          %p227 = pneg %p79
        $region46: #{tpu_custom_call.1} parent=43 // pred_check_branch
          %229 = sbr.rel (%p227) target = $region48
        $region47: #{tpu_custom_call.1} parent=43 // pred_region
          %s230 = smul.u32 4, %s21
          %p231 = scmp.lt.s32.totalorder %s230, 7
          %s232 = scalar_select %p231, %s230, 7
          %s233 = smul.addr %s232, 8
          %s234 = scalar_lea.vmem %s1, %s233
        $region48: #{tpu_custom_call.1} parent=43 // pred_fallthru
          _
      $region44: #{tpu_custom_call.1} parent=5 // pred_fallthru
        _
    $region6: #{tpu_custom_call.1} parent=1 // loop_footer
      %s14 = sadd.s32 1, %s10
    $region7: #{tpu_custom_call.1} parent=1 // loop_footer_branch
      %9 = sbr.rel target = $region3
    $region8: #{tpu_custom_call.1} parent=1 // loop_exit
      _
    %235 = vsyncpa [#allocation3], 1
    %s236 = scalar_lea.sflag [#allocation3], 1
    %237 = vsyncpa %s236, 1

</llo_original>
